<compile_context>
chip_gen: v5e
topology: v5e:2x2
jax: 0.10.0
libtpu: 0.0.40
codegen_flags: <defaults>
</compile_context>

<pallas_src>
import math

import jax
import jax.numpy as jnp
from jax.experimental import pallas as pl
from jax.experimental.pallas import tpu as pltpu


# ----------------------------------------------------------------------------
# VMEM-aware sizing helpers (one code path for v5e / v6e / v7x)
# ----------------------------------------------------------------------------
def _vmem_limit_bytes():
    try:
        cap = int(pltpu.get_tpu_info().vmem_capacity_bytes)
    except Exception:
        cap = 64 * 1024 * 1024          # conservative: works on every gen
    return max(16 * 1024 * 1024, min(int(cap * 0.75), 96 * 1024 * 1024))


def _pick_conv_row_tile(ho, wo, cin, cout, out_itemsize, batch, byte_budget):
    """Pick t | Ho output rows per grid step (VMEM-bounded, v7x >=2 steps)."""
    divisors = [d for d in range(1, ho + 1) if ho % d == 0]

    def aligned(d):
        # output block second-minor dim must be a multiple of 8 or the full dim
        return d == ho or (d * wo) % 8 == 0

    def step_bytes(d):
        x_blk = d * 2 * (wo + 1) * 2 * cin * 2            # bf16 input block
        o_blk = d * wo * cout * out_itemsize
        scratch = d * wo * (cout * 4 + 2 * cin * 2)       # acc + tap temporaries
        return 2 * (x_blk + o_blk) + scratch              # double buffered

    valid = sorted((d for d in divisors if aligned(d)), reverse=True)
    fitting = [d for d in valid if step_bytes(d) <= byte_budget]
    t = fitting[0] if fitting else valid[-1]
    # v7x megacore: prefer >= 2 grid steps when batch alone does not give them.
    if batch * (ho // t) < 2:
        smaller = [d for d in valid
                   if d < t and batch * (ho // d) >= 2
                   and step_bytes(d) <= byte_budget]
        if smaller:
            t = smaller[0]
    return t


# ----------------------------------------------------------------------------
# Conv path: fused im2col, 9 accumulated MXU taps per (batch, row-tile) block.
# ----------------------------------------------------------------------------
def _make_conv_kernel(t, wo, cin, cout):
    def kernel(xa_ref, xb_ref, w_ref, b_ref, o_ref):
        # xa: (t, 2, Wo+1, 2*Cin)  -> row groups r*t .. r*t+t-1, both parities
        # xb: (1, 1, Wo+1, 2*Cin)  -> extra even row group r*t+t (bottom kh=2)
        xa = xa_ref[...]
        xb = xb_ref[...].reshape(1, wo + 1, 2 * cin)

        rows_kh0 = xa[:, 0]                                  # padded rows 2*oh
        rows_kh1 = xa[:, 1]                                  # padded rows 2*oh+1
        if t > 1:
            rows_kh2 = jnp.concatenate([xa[1:, 0], xb], axis=0)  # rows 2*oh+2
        else:
            rows_kh2 = xb
        rows = (rows_kh0, rows_kh1, rows_kh2)

        acc = None
        for kh in range(3):
            src = rows[kh]                                   # (t, Wo+1, 2*Cin)
            for kw in range(3):
                if kw == 0:
                    tap = src[:, :wo, :cin]                  # padded col 2*ow
                elif kw == 1:
                    tap = src[:, :wo, cin:]                  # padded col 2*ow+1
                else:
                    tap = src[:, 1:, :cin]                   # padded col 2*ow+2
                tap = tap.reshape(t * wo, cin)
                part = jnp.dot(tap, w_ref[3 * kh + kw],
                               preferred_element_type=jnp.float32)
                acc = part if acc is None else acc + part
        o_ref[...] = (acc + b_ref[...]).astype(o_ref.dtype)
    return kernel


def _conv_downsample_2d(x_nchw, w_oihw, bias, compute_dtype=jnp.bfloat16):
    B, Cin, H, W = x_nchw.shape
    Cout = w_oihw.shape[0]
    Ho = (H - 1) // 2 + 1
    Wo = (W - 1) // 2 + 1
    out_dtype = x_nchw.dtype
    out_itemsize = jnp.dtype(out_dtype).itemsize

    # Fused-im2col input view: NHWC, zero-padded to (2*Ho+2, 2*Wo+2), then a
    # free contiguous reshape pairing rows/columns so every conv tap is a plain
    # slice in-kernel.  No (M, 9*Cin) patch matrix ever touches HBM.
    x_nhwc = jnp.transpose(x_nchw, (0, 2, 3, 1)).astype(compute_dtype)
    xp = jnp.pad(
        x_nhwc, ((0, 0), (1, 2 * Ho + 1 - H), (1, 2 * Wo + 1 - W), (0, 0)))
    xv = xp.reshape(B, Ho + 1, 2, Wo + 1, 2 * Cin)

    # Per-tap weights (9, Cin, Cout), tap index = 3*kh + kw; bias in f32.
    w9 = (jnp.transpose(w_oihw, (2, 3, 1, 0))
          .reshape(9, Cin, Cout).astype(compute_dtype))
    b2 = bias.reshape(1, Cout).astype(jnp.float32)

    vmem_limit = _vmem_limit_bytes()
    budget = max(2 * 1024 * 1024, int(vmem_limit * 0.6) - w9.size * 2)
    t = _pick_conv_row_tile(Ho, Wo, Cin, Cout, out_itemsize, B, budget)
    n_r = Ho // t

    kernel = _make_conv_kernel(t, Wo, Cin, Cout)

    cost = pl.CostEstimate(
        flops=2 * B * Ho * Wo * 9 * Cin * Cout,
        transcendentals=0,
        bytes_accessed=(xv.size * 2 + w9.size * 2 + b2.size * 4
                        + B * Ho * Wo * Cout * out_itemsize),
    )

    out_flat = pl.pallas_call(
        kernel,
        out_shape=jax.ShapeDtypeStruct((B, Ho * Wo, Cout), out_dtype),
        grid_spec=pltpu.PrefetchScalarGridSpec(
            num_scalar_prefetch=0,
            grid=(B, n_r),
            in_specs=[
                # main slab: row groups [r*t, r*t + t), both row parities
                pl.BlockSpec((None, t, 2, Wo + 1, 2 * Cin),
                             lambda b, r: (b, r, 0, 0, 0)),
                # one extra even row group (r*t + t) for the last row's kh=2 taps
                pl.BlockSpec((None, 1, 1, Wo + 1, 2 * Cin),
                             lambda b, r: (b, (r + 1) * t, 0, 0, 0)),
                # full weight / bias blocks: constant index -> VMEM resident
                pl.BlockSpec((9, Cin, Cout), lambda b, r: (0, 0, 0)),
                pl.BlockSpec((1, Cout), lambda b, r: (0, 0)),
            ],
            out_specs=pl.BlockSpec((None, t * Wo, Cout), lambda b, r: (b, r, 0)),
        ),
        compiler_params=pltpu.CompilerParams(
            dimension_semantics=("parallel", "parallel"),
            vmem_limit_bytes=vmem_limit,
        ),
        cost_estimate=cost,
    )(xv, xv, w9, b2)

    # TODO(synk): emit NCHW blocks straight from the kernel (or keep NHWC
    # downstream) to save this output-sized XLA transpose pass.
    out = out_flat.reshape(B, Ho, Wo, Cout)
    return jnp.transpose(out, (0, 3, 1, 2))                  # NCHW


# ----------------------------------------------------------------------------
# Pool path: 2x2 average pool, stride 2, lane-dense grouped GEMM on NCHW.
# ----------------------------------------------------------------------------
def _pool_kernel(x_ref, p_ref, o_ref):
    o_ref[...] = jnp.dot(
        x_ref[...], p_ref[...],
        precision=jax.lax.Precision.HIGHEST,
        preferred_element_type=jnp.float32,
    ).astype(o_ref.dtype)


def _pick_pool_group(n_rows, wo):
    """Pack g output rows per GEMM row so the output last dim is lane-dense."""
    if wo >= 128:
        return 1
    g0 = 128 // math.gcd(wo, 128)
    if n_rows % g0 == 0 and g0 * wo <= 512:
        return g0
    cap = max(1, 256 // wo)
    g = 1
    for d in range(1, cap + 1):
        if n_rows % d == 0:
            g = d
    return g


def _avgpool_downsample_2d(x_nchw):
    B, C, H, W = x_nchw.shape
    Ho, Wo = H // 2, W // 2
    if (H % 2) or (W % 2):
        # TODO(synk): odd spatial dims force a strided-slice copy here.
        x_nchw = x_nchw[:, :, : 2 * Ho, : 2 * Wo]
        H, W = 2 * Ho, 2 * Wo
    dtype = x_nchw.dtype
    itemsize = jnp.dtype(dtype).itemsize
    R = B * C * Ho

    g = _pick_pool_group(R, Wo)
    R2 = R // g
    L = g * 2 * W                       # grouped input row length (g * 2 rows)
    No = g * Wo                         # grouped output row length (>=128 lanes)

    x_rows = x_nchw.reshape(R2, L)      # free, contiguous reshape of NCHW

    # Constant pooling matrix (L, No): block-diagonal over the g packed rows;
    # each output column picks its 4 window elements with weight 0.25 (exact).
    rI = jnp.arange(L)
    q_in = rI // (2 * W)
    w_in = rI % W
    cI = jnp.arange(No)
    q_out = cI // Wo
    ow = cI % Wo
    pool_mat = ((q_in[:, None] == q_out[None, :])
                & ((w_in // 2)[:, None] == ow[None, :])).astype(dtype) * 0.25

    vmem_limit = _vmem_limit_bytes()
    row_bytes = (L + No) * itemsize
    budget = int(vmem_limit * 0.6) - pool_mat.size * itemsize
    t_rows = max(8, (budget // max(1, 2 * row_bytes)) // 8 * 8)
    if t_rows >= R2:
        t_rows = R2                     # full extent block (always legal)
    n_r = pl.cdiv(R2, t_rows)

    cost = pl.CostEstimate(
        flops=2 * R2 * L * No,
        transcendentals=0,
        bytes_accessed=(x_rows.size + pool_mat.size + R2 * No) * itemsize,
    )

    out_rows = pl.pallas_call(
        _pool_kernel,
        out_shape=jax.ShapeDtypeStruct((R2, No), dtype),
        grid_spec=pltpu.PrefetchScalarGridSpec(
            num_scalar_prefetch=0,
            grid=(n_r,),
            in_specs=[
                pl.BlockSpec((t_rows, L), lambda i: (i, 0)),
                pl.BlockSpec((L, No), lambda i: (0, 0)),
            ],
            out_specs=pl.BlockSpec((t_rows, No), lambda i: (i, 0)),
        ),
        compiler_params=pltpu.CompilerParams(
            dimension_semantics=("parallel",),
            vmem_limit_bytes=vmem_limit,
        ),
        cost_estimate=cost,
    )(x_rows, pool_mat)

    return out_rows.reshape(B, C, Ho, Wo)


# ----------------------------------------------------------------------------
# Module-equivalent wrapper
# ----------------------------------------------------------------------------
class DownsamplePallas:
    """Pallas port of glide_text2im Downsample (dims=2 only)."""

    def __init__(self, channels, use_conv, dims=2, out_channels=None, key=None,
                 conv_compute_dtype=jnp.bfloat16):
        assert dims == 2, "only dims=2 implemented"
        # TODO(synk): dims=1 and dims=3 variants not implemented.
        self.channels = channels
        self.out_channels = out_channels or channels
        self.use_conv = use_conv
        self.dims = dims
        # Explicit, opt-in MXU operand precision for the conv path (bf16 by
        # default; pass jnp.float32 for full-precision GLIDE eval).
        self.conv_compute_dtype = conv_compute_dtype
        if use_conv:
            key = key if key is not None else jax.random.PRNGKey(0)
            kw, kb = jax.random.split(key)
            fan_in = channels * 3 * 3
            bound = 1.0 / (fan_in ** 0.5)
            # PyTorch Conv2d weight layout: (Cout, Cin, kH, kW)
            self.weight = jax.random.uniform(
                kw, (self.out_channels, channels, 3, 3),
                minval=-bound, maxval=bound, dtype=jnp.float32)
            self.bias = jax.random.uniform(
                kb, (self.out_channels,),
                minval=-bound, maxval=bound, dtype=jnp.float32)
        else:
            assert self.channels == self.out_channels

    def __call__(self, x_nchw):
        assert x_nchw.shape[1] == self.channels
        if self.use_conv:
            return _conv_downsample_2d(
                x_nchw, self.weight, self.bias,
                compute_dtype=self.conv_compute_dtype)
        return _avgpool_downsample_2d(x_nchw)


# ----------------------------------------------------------------------------
# Self-check
# ----------------------------------------------------------------------------
def _conv_reference(x_nchw, w_oihw, bias, cast_bf16):
    if cast_bf16:
        x_nchw = x_nchw.astype(jnp.bfloat16)
        w_oihw = w_oihw.astype(jnp.bfloat16)
    y = jax.lax.conv_general_dilated(
        x_nchw, w_oihw, window_strides=(2, 2), padding=((1, 1), (1, 1)),
        dimension_numbers=("NCHW", "OIHW", "NCHW"),
        preferred_element_type=jnp.float32)
    return y + bias.reshape(1, -1, 1, 1)


def _pool_reference(x_nchw):
    B, C, H, W = x_nchw.shape
    return x_nchw.reshape(B, C, H // 2, 2, W // 2, 2).mean(axis=(3, 5))


if __name__ == "__main__":
    key = jax.random.PRNGKey(0)
    kx, kp = jax.random.split(key)

    B, C, H, W = 2, 4, 16, 16
    x = jax.random.normal(kx, (B, C, H, W), dtype=jnp.float32)

    # use_conv=True path (Conv2d(C, 8, 3, stride=2, padding=1))
    down_conv = DownsamplePallas(C, use_conv=True, dims=2, out_channels=8, key=kp)
    y_conv = jax.block_until_ready(down_conv(x))
    assert y_conv.shape == (B, 8, H // 2, W // 2), y_conv.shape
    # Tight check against a conv that also feeds the MXU bf16 operands with
    # f32 accumulation (the kernel's numerics)...
    y_ref_bf16 = _conv_reference(x, down_conv.weight, down_conv.bias, cast_bf16=True)
    assert jnp.allclose(y_conv, y_ref_bf16, atol=2e-3, rtol=2e-3)
    # ...and a loose sanity check against the full-f32 reference.
    y_ref_f32 = _conv_reference(x, down_conv.weight, down_conv.bias, cast_bf16=False)
    assert jnp.allclose(y_conv, y_ref_f32, atol=8e-2, rtol=8e-2)

    # use_conv=False path (AvgPool2d(kernel_size=2, stride=2))
    down_pool = DownsamplePallas(C, use_conv=False, dims=2)
    y_pool = jax.block_until_ready(down_pool(x))
    y_pool_ref = _pool_reference(x)
    assert y_pool.shape == (B, C, H // 2, W // 2), y_pool.shape
    assert jnp.allclose(y_pool, y_pool_ref, atol=1e-5, rtol=1e-5)

    print("KERNEL_OK")
</pallas_src>

<mosaic_0001>
module attributes {stable_mosaic.version = 11 : i64} {
  func.func @kernel(%arg0: i32, %arg1: i32, %arg2: memref<1x8x2x9x8xbf16, #tpu.memory_space<vmem>>, %arg3: memref<1x1x1x9x8xbf16, #tpu.memory_space<vmem>>, %arg4: memref<9x4x8xbf16, #tpu.memory_space<vmem>>, %arg5: memref<1x8xf32, #tpu.memory_space<vmem>>, %arg6: memref<1x64x8xf32, #tpu.memory_space<vmem>>) attributes {dimension_semantics = [#tpu.dimension_semantics<parallel>, #tpu.dimension_semantics<parallel>], iteration_bounds = array<i64: 2, 1>, scalar_prefetch = 0 : i64, scratch_operands = 0 : i64, tpu.core_type = #tpu.core_type<tc>, window_params = [{transform_indices = @transform_0, window_bounds = array<i64: 1, 8, 2, 9, 8>}, {transform_indices = @transform_1, window_bounds = array<i64: 1, 1, 1, 9, 8>}, {pipeline_mode = #tpu.pipeline_mode<synchronous>, transform_indices = @transform_2, window_bounds = array<i64: 9, 4, 8>}, {pipeline_mode = #tpu.pipeline_mode<synchronous>, transform_indices = @transform_3, window_bounds = array<i64: 1, 8>}, {transform_indices = @transform_4, window_bounds = array<i64: 1, 64, 8>}]} {
    %c0 = arith.constant 0 : index
    %c0_0 = arith.constant 0 : index
    %c0_1 = arith.constant 0 : index
    %c0_2 = arith.constant 0 : index
    %c0_3 = arith.constant 0 : index
    %0 = vector.load %arg2[%c0, %c0_0, %c0_1, %c0_2, %c0_3] : memref<1x8x2x9x8xbf16, #tpu.memory_space<vmem>>, vector<1x8x2x9x8xbf16>
    %1 = vector.shape_cast %0 : vector<1x8x2x9x8xbf16> to vector<8x2x9x8xbf16>
    %c0_4 = arith.constant 0 : index
    %c0_5 = arith.constant 0 : index
    %c0_6 = arith.constant 0 : index
    %c0_7 = arith.constant 0 : index
    %c0_8 = arith.constant 0 : index
    %2 = vector.load %arg3[%c0_4, %c0_5, %c0_6, %c0_7, %c0_8] : memref<1x1x1x9x8xbf16, #tpu.memory_space<vmem>>, vector<1x1x1x9x8xbf16>
    %3 = vector.shape_cast %2 : vector<1x1x1x9x8xbf16> to vector<1x1x9x8xbf16>
    %4 = vector.shape_cast %3 : vector<1x1x9x8xbf16> to vector<1x9x8xbf16>
    %5 = vector.extract_strided_slice %1 {offsets = [0, 0, 0, 0], sizes = [8, 1, 9, 8], strides = [1, 1, 1, 1]} : vector<8x2x9x8xbf16> to vector<8x1x9x8xbf16>
    %6 = vector.shape_cast %5 : vector<8x1x9x8xbf16> to vector<8x9x8xbf16>
    %7 = vector.extract_strided_slice %1 {offsets = [0, 1, 0, 0], sizes = [8, 1, 9, 8], strides = [1, 1, 1, 1]} : vector<8x2x9x8xbf16> to vector<8x1x9x8xbf16>
    %8 = vector.shape_cast %7 : vector<8x1x9x8xbf16> to vector<8x9x8xbf16>
    %9 = vector.extract_strided_slice %1 {offsets = [1, 0, 0, 0], sizes = [7, 1, 9, 8], strides = [1, 1, 1, 1]} : vector<8x2x9x8xbf16> to vector<7x1x9x8xbf16>
    %10 = vector.shape_cast %9 : vector<7x1x9x8xbf16> to vector<7x9x8xbf16>
    %11 = tpu.concatenate %10, %4 in 0 : vector<7x9x8xbf16>, vector<1x9x8xbf16> -> vector<8x9x8xbf16>
    %12 = vector.extract_strided_slice %6 {offsets = [0, 0, 0], sizes = [8, 8, 4], strides = [1, 1, 1]} : vector<8x9x8xbf16> to vector<8x8x4xbf16>
    %13 = vector.shape_cast %12 : vector<8x8x4xbf16> to vector<64x4xbf16>
    %c0_9 = arith.constant 0 : index
    %c0_10 = arith.constant 0 : index
    %c0_11 = arith.constant 0 : index
    %14 = vector.load %arg4[%c0_9, %c0_10, %c0_11] : memref<9x4x8xbf16, #tpu.memory_space<vmem>>, vector<1x4x8xbf16>
    %15 = vector.shape_cast %14 : vector<1x4x8xbf16> to vector<4x8xbf16>
    %cst = arith.constant dense<0.000000e+00> : vector<64x8xf32>
    %16 = tpu.matmul %13, %15, %cst {dimension_numbers = #tpu.dot_dimension_numbers<[1], [0], [0], [1], [0, 0, 1, 1], [], []>} : vector<64x4xbf16>, vector<4x8xbf16>, vector<64x8xf32> -> vector<64x8xf32>
    %17 = vector.extract_strided_slice %6 {offsets = [0, 0, 4], sizes = [8, 8, 4], strides = [1, 1, 1]} : vector<8x9x8xbf16> to vector<8x8x4xbf16>
    %18 = vector.shape_cast %17 : vector<8x8x4xbf16> to vector<64x4xbf16>
    %c1 = arith.constant 1 : index
    %c0_12 = arith.constant 0 : index
    %c0_13 = arith.constant 0 : index
    %19 = vector.load %arg4[%c1, %c0_12, %c0_13] : memref<9x4x8xbf16, #tpu.memory_space<vmem>>, vector<1x4x8xbf16>
    %20 = vector.shape_cast %19 : vector<1x4x8xbf16> to vector<4x8xbf16>
    %cst_14 = arith.constant dense<0.000000e+00> : vector<64x8xf32>
    %21 = tpu.matmul %18, %20, %cst_14 {dimension_numbers = #tpu.dot_dimension_numbers<[1], [0], [0], [1], [0, 0, 1, 1], [], []>} : vector<64x4xbf16>, vector<4x8xbf16>, vector<64x8xf32> -> vector<64x8xf32>
    %22 = arith.addf %16, %21 : vector<64x8xf32>
    %23 = vector.extract_strided_slice %6 {offsets = [0, 1, 0], sizes = [8, 8, 4], strides = [1, 1, 1]} : vector<8x9x8xbf16> to vector<8x8x4xbf16>
    %24 = vector.shape_cast %23 : vector<8x8x4xbf16> to vector<64x4xbf16>
    %c2 = arith.constant 2 : index
    %c0_15 = arith.constant 0 : index
    %c0_16 = arith.constant 0 : index
    %25 = vector.load %arg4[%c2, %c0_15, %c0_16] : memref<9x4x8xbf16, #tpu.memory_space<vmem>>, vector<1x4x8xbf16>
    %26 = vector.shape_cast %25 : vector<1x4x8xbf16> to vector<4x8xbf16>
    %cst_17 = arith.constant dense<0.000000e+00> : vector<64x8xf32>
    %27 = tpu.matmul %24, %26, %cst_17 {dimension_numbers = #tpu.dot_dimension_numbers<[1], [0], [0], [1], [0, 0, 1, 1], [], []>} : vector<64x4xbf16>, vector<4x8xbf16>, vector<64x8xf32> -> vector<64x8xf32>
    %28 = arith.addf %22, %27 : vector<64x8xf32>
    %29 = vector.extract_strided_slice %8 {offsets = [0, 0, 0], sizes = [8, 8, 4], strides = [1, 1, 1]} : vector<8x9x8xbf16> to vector<8x8x4xbf16>
    %30 = vector.shape_cast %29 : vector<8x8x4xbf16> to vector<64x4xbf16>
    %c3 = arith.constant 3 : index
    %c0_18 = arith.constant 0 : index
    %c0_19 = arith.constant 0 : index
    %31 = vector.load %arg4[%c3, %c0_18, %c0_19] : memref<9x4x8xbf16, #tpu.memory_space<vmem>>, vector<1x4x8xbf16>
    %32 = vector.shape_cast %31 : vector<1x4x8xbf16> to vector<4x8xbf16>
    %cst_20 = arith.constant dense<0.000000e+00> : vector<64x8xf32>
    %33 = tpu.matmul %30, %32, %cst_20 {dimension_numbers = #tpu.dot_dimension_numbers<[1], [0], [0], [1], [0, 0, 1, 1], [], []>} : vector<64x4xbf16>, vector<4x8xbf16>, vector<64x8xf32> -> vector<64x8xf32>
    %34 = arith.addf %28, %33 : vector<64x8xf32>
    %35 = vector.extract_strided_slice %8 {offsets = [0, 0, 4], sizes = [8, 8, 4], strides = [1, 1, 1]} : vector<8x9x8xbf16> to vector<8x8x4xbf16>
    %36 = vector.shape_cast %35 : vector<8x8x4xbf16> to vector<64x4xbf16>
    %c4 = arith.constant 4 : index
    %c0_21 = arith.constant 0 : index
    %c0_22 = arith.constant 0 : index
    %37 = vector.load %arg4[%c4, %c0_21, %c0_22] : memref<9x4x8xbf16, #tpu.memory_space<vmem>>, vector<1x4x8xbf16>
    %38 = vector.shape_cast %37 : vector<1x4x8xbf16> to vector<4x8xbf16>
    %cst_23 = arith.constant dense<0.000000e+00> : vector<64x8xf32>
    %39 = tpu.matmul %36, %38, %cst_23 {dimension_numbers = #tpu.dot_dimension_numbers<[1], [0], [0], [1], [0, 0, 1, 1], [], []>} : vector<64x4xbf16>, vector<4x8xbf16>, vector<64x8xf32> -> vector<64x8xf32>
    %40 = arith.addf %34, %39 : vector<64x8xf32>
    %41 = vector.extract_strided_slice %8 {offsets = [0, 1, 0], sizes = [8, 8, 4], strides = [1, 1, 1]} : vector<8x9x8xbf16> to vector<8x8x4xbf16>
    %42 = vector.shape_cast %41 : vector<8x8x4xbf16> to vector<64x4xbf16>
    %c5 = arith.constant 5 : index
    %c0_24 = arith.constant 0 : index
    %c0_25 = arith.constant 0 : index
    %43 = vector.load %arg4[%c5, %c0_24, %c0_25] : memref<9x4x8xbf16, #tpu.memory_space<vmem>>, vector<1x4x8xbf16>
    %44 = vector.shape_cast %43 : vector<1x4x8xbf16> to vector<4x8xbf16>
    %cst_26 = arith.constant dense<0.000000e+00> : vector<64x8xf32>
    %45 = tpu.matmul %42, %44, %cst_26 {dimension_numbers = #tpu.dot_dimension_numbers<[1], [0], [0], [1], [0, 0, 1, 1], [], []>} : vector<64x4xbf16>, vector<4x8xbf16>, vector<64x8xf32> -> vector<64x8xf32>
    %46 = arith.addf %40, %45 : vector<64x8xf32>
    %47 = vector.extract_strided_slice %11 {offsets = [0, 0, 0], sizes = [8, 8, 4], strides = [1, 1, 1]} : vector<8x9x8xbf16> to vector<8x8x4xbf16>
    %48 = vector.shape_cast %47 : vector<8x8x4xbf16> to vector<64x4xbf16>
    %c6 = arith.constant 6 : index
    %c0_27 = arith.constant 0 : index
    %c0_28 = arith.constant 0 : index
    %49 = vector.load %arg4[%c6, %c0_27, %c0_28] : memref<9x4x8xbf16, #tpu.memory_space<vmem>>, vector<1x4x8xbf16>
    %50 = vector.shape_cast %49 : vector<1x4x8xbf16> to vector<4x8xbf16>
    %cst_29 = arith.constant dense<0.000000e+00> : vector<64x8xf32>
    %51 = tpu.matmul %48, %50, %cst_29 {dimension_numbers = #tpu.dot_dimension_numbers<[1], [0], [0], [1], [0, 0, 1, 1], [], []>} : vector<64x4xbf16>, vector<4x8xbf16>, vector<64x8xf32> -> vector<64x8xf32>
    %52 = arith.addf %46, %51 : vector<64x8xf32>
    %53 = vector.extract_strided_slice %11 {offsets = [0, 0, 4], sizes = [8, 8, 4], strides = [1, 1, 1]} : vector<8x9x8xbf16> to vector<8x8x4xbf16>
    %54 = vector.shape_cast %53 : vector<8x8x4xbf16> to vector<64x4xbf16>
    %c7 = arith.constant 7 : index
    %c0_30 = arith.constant 0 : index
    %c0_31 = arith.constant 0 : index
    %55 = vector.load %arg4[%c7, %c0_30, %c0_31] : memref<9x4x8xbf16, #tpu.memory_space<vmem>>, vector<1x4x8xbf16>
    %56 = vector.shape_cast %55 : vector<1x4x8xbf16> to vector<4x8xbf16>
    %cst_32 = arith.constant dense<0.000000e+00> : vector<64x8xf32>
    %57 = tpu.matmul %54, %56, %cst_32 {dimension_numbers = #tpu.dot_dimension_numbers<[1], [0], [0], [1], [0, 0, 1, 1], [], []>} : vector<64x4xbf16>, vector<4x8xbf16>, vector<64x8xf32> -> vector<64x8xf32>
    %58 = arith.addf %52, %57 : vector<64x8xf32>
    %59 = vector.extract_strided_slice %11 {offsets = [0, 1, 0], sizes = [8, 8, 4], strides = [1, 1, 1]} : vector<8x9x8xbf16> to vector<8x8x4xbf16>
    %60 = vector.shape_cast %59 : vector<8x8x4xbf16> to vector<64x4xbf16>
    %c8 = arith.constant 8 : index
    %c0_33 = arith.constant 0 : index
    %c0_34 = arith.constant 0 : index
    %61 = vector.load %arg4[%c8, %c0_33, %c0_34] : memref<9x4x8xbf16, #tpu.memory_space<vmem>>, vector<1x4x8xbf16>
    %62 = vector.shape_cast %61 : vector<1x4x8xbf16> to vector<4x8xbf16>
    %cst_35 = arith.constant dense<0.000000e+00> : vector<64x8xf32>
    %63 = tpu.matmul %60, %62, %cst_35 {dimension_numbers = #tpu.dot_dimension_numbers<[1], [0], [0], [1], [0, 0, 1, 1], [], []>} : vector<64x4xbf16>, vector<4x8xbf16>, vector<64x8xf32> -> vector<64x8xf32>
    %64 = arith.addf %58, %63 : vector<64x8xf32>
    %c0_36 = arith.constant 0 : index
    %c0_37 = arith.constant 0 : index
    %65 = vector.load %arg5[%c0_36, %c0_37] : memref<1x8xf32, #tpu.memory_space<vmem>>, vector<1x8xf32>
    %66 = vector.broadcast %65 : vector<1x8xf32> to vector<64x8xf32>
    %67 = arith.addf %64, %66 : vector<64x8xf32>
    %c0_38 = arith.constant 0 : index
    %c0_39 = arith.constant 0 : index
    %c0_40 = arith.constant 0 : index
    %68 = vector.load %arg6[%c0_38, %c0_39, %c0_40] : memref<1x64x8xf32, #tpu.memory_space<vmem>>, vector<1x64x8xf32>
    %69 = vector.shape_cast %68 : vector<1x64x8xf32> to vector<64x8xf32>
    %70 = vector.shape_cast %67 : vector<64x8xf32> to vector<1x64x8xf32>
    tpu.vector_store %arg6[%c0_38, %c0_39, %c0_40], %70 {strides = array<i32>} : memref<1x64x8xf32, #tpu.memory_space<vmem>>, vector<1x64x8xf32>,
    return
  }
  func.func @transform_0(%arg0: i32, %arg1: i32) -> (i32, i32, i32, i32, i32) {
    %c0_i32 = arith.constant 0 : i32
    %c0_i32_0 = arith.constant 0 : i32
    %c0_i32_1 = arith.constant 0 : i32
    %c0_i32_2 = arith.constant 0 : i32
    return %arg0, %arg1, %c0_i32, %c0_i32_0, %c0_i32_1 : i32, i32, i32, i32, i32
  }
  func.func @transform_1(%arg0: i32, %arg1: i32) -> (i32, i32, i32, i32, i32) {
    %c1_i32 = arith.constant 1 : i32
    %0 = arith.addi %arg1, %c1_i32 : i32
    %c8_i32 = arith.constant 8 : i32
    %1 = arith.muli %0, %c8_i32 : i32
    %c0_i32 = arith.constant 0 : i32
    %c0_i32_0 = arith.constant 0 : i32
    %c0_i32_1 = arith.constant 0 : i32
    %c0_i32_2 = arith.constant 0 : i32
    return %arg0, %1, %c0_i32, %c0_i32_0, %c0_i32_1 : i32, i32, i32, i32, i32
  }
  func.func @transform_2(%arg0: i32, %arg1: i32) -> (i32, i32, i32) {
    %c0_i32 = arith.constant 0 : i32
    %c0_i32_0 = arith.constant 0 : i32
    %c0_i32_1 = arith.constant 0 : i32
    %c0_i32_2 = arith.constant 0 : i32
    return %c0_i32, %c0_i32_0, %c0_i32_1 : i32, i32, i32
  }
  func.func @transform_3(%arg0: i32, %arg1: i32) -> (i32, i32) {
    %c0_i32 = arith.constant 0 : i32
    %c0_i32_0 = arith.constant 0 : i32
    %c0_i32_1 = arith.constant 0 : i32
    return %c0_i32, %c0_i32_0 : i32, i32
  }
  func.func @transform_4(%arg0: i32, %arg1: i32) -> (i32, i32, i32) {
    %c0_i32 = arith.constant 0 : i32
    %c0_i32_0 = arith.constant 0 : i32
    return %arg0, %arg1, %c0_i32 : i32, i32, i32
  }
}

</mosaic_0001>

<llo_original>
// kernel: tpu_custom_call.1
$region0: #{tpu_custom_call.1}
  #allocation0 [shape = 'u32[]', space=smem, size = 0x4, offset = 0x4, fixed_abs, tag = 'smem constant byte address 0x4 - core index']
  #allocation1 [shape = 'u32[72,128]{1,0:T(1,128)}', space=vmem, size = 0x9000, scoped, tag = 'internal scratch']
  %s0 = inlined_call_operand.vmem [shape: bf16[2,9,2,9,8], index: 0, kind: input, shape index: {}]
  %s1 = inlined_call_operand.vmem [shape: bf16[2,9,2,9,8], index: 1, kind: input, shape index: {}]
  %s2 = inlined_call_operand.vmem [shape: bf16[9,4,8], index: 2, kind: input, shape index: {}]
  %s3 = inlined_call_operand.vmem [shape: f32[1,8], index: 3, kind: input, shape index: {}]
  %s4 = inlined_call_operand.vmem [shape: f32[2,64,8], index: 4, kind: output, shape index: {}]
  %s5 = sld [smem:[#allocation0]]
  $region49: #{tpu_custom_call.1} parent=0
    _
  %s7 = ssub.s32 1, %s5
  %s8 = scalar_select 0, %s7, %s5
  loop: start=0, step=1, limit=4
  $region2: #{tpu_custom_call.1} parent=0 // loop_pre_header
    _
  $region3: #{tpu_custom_call.1} parent=0 // loop_header
    %s10 = sphi 0, %s14
    %p11 = scmp.ge.s32.totalorder %s10, 4
    %s17 = sphi 0, %s29
    %s18 = sphi 0, %s25
    %s19 = sphi 0, %s17
    %s20 = sphi 0, %s18
    %s21 = sphi 0, %s19
    %s22 = sphi 0, %s20
    %s34 = sphi 0, %s36
    %s37 = sphi 0, %s34
    %s38 = sphi 0, %s37
    %s54 = sphi 0, %s38
    %s66 = sphi 0, %s68
    %s69 = sphi 0, %s66
    %s70 = sphi 0, %s69
    %s86 = sphi 0, %s70
    %s90 = sphi 0, %s90
    %s92 = sphi 0, %s90
    %s93 = sphi 0, %s92
    %s107 = sphi 0, %s93
    %s111 = sphi 0, %s111
    %s113 = sphi 0, %s111
    %s114 = sphi 0, %s113
    %s128 = sphi 0, %s114
    %s136 = sphi 0, %s138
    %s139 = sphi 0, %s136
    %s140 = sphi 0, %s139
    %s156 = sphi 0, %s140
  $region4: #{tpu_custom_call.1} parent=0 // loop_header_branch
    %13 = sbr.rel (%p11) target = $region8
  $region5: #{tpu_custom_call.1} parent=0 // loop_body
    %s15 = ssub.s32 %s10, 1
    %s16 = ssub.s32 %s10, 2
    %s23 = sadd.s32 1, %s18
    %p24 = scmp.ge.s32.totalorder %s23, 1
    %s25 = scalar_select %p24, 0, %s23
    %s26 = sadd.s32 1, %s17
    %s27 = scalar_select %p24, %s26, %s17
    %p28 = scmp.ge.s32.totalorder %s27, 2
    %s29 = scalar_select %p28, 0, %s27
    %s30 = ssub.s32 %s17, %s29
    %s31 = ssub.s32 %s18, %s25
    %s32 = sor.u32 %s30, %s31
    %p33 = scmp.eq.s32.totalorder %s32, 0
    %s35 = sadd.s32 %s34, 1
    %s36 = scalar_select %p33, %s34, %s35
    %p39 = pneg %p33
    %p40 = scmp.eq.s32.totalorder %s10, 1
    %p41 = por %p39, %p40
    %p42 = scmp.ne.s32.totalorder %s34, %s37
    %p43 = scmp.eq.s32.totalorder %s10, 0
    %p44 = por %p42, %p43
    %p45 = scmp.ne.s32.totalorder %s34, %s37
    %p46 = scmp.eq.s32.totalorder %s15, 1
    %p47 = por %p45, %p46
    %p48 = scmp.ne.s32.totalorder %s37, %s38
    %p49 = scmp.eq.s32.totalorder %s15, 0
    %p50 = por %p48, %p49
    %p51 = scmp.ne.s32.totalorder %s37, %s38
    %p52 = scmp.eq.s32.totalorder %s16, 1
    %p53 = por %p51, %p52
    %p55 = scmp.ne.s32.totalorder %s38, %s54
    %p56 = scmp.eq.s32.totalorder %s16, 0
    %p57 = por %p55, %p56
    %s58 = sadd.s32 %s18, 1
    %s59 = smul.u32 %s58, 8
    %s60 = sadd.s32 %s25, 1
    %s61 = smul.u32 %s60, 8
    %s62 = ssub.s32 %s17, %s29
    %s63 = ssub.s32 %s59, %s61
    %s64 = sor.u32 %s62, %s63
    %p65 = scmp.eq.s32.totalorder %s64, 0
    %s67 = sadd.s32 %s66, 1
    %s68 = scalar_select %p65, %s66, %s67
    %p71 = pneg %p65
    %p72 = scmp.eq.s32.totalorder %s10, 1
    %p73 = por %p71, %p72
    %p74 = scmp.ne.s32.totalorder %s66, %s69
    %p75 = scmp.eq.s32.totalorder %s10, 0
    %p76 = por %p74, %p75
    %p77 = scmp.ne.s32.totalorder %s66, %s69
    %p78 = scmp.eq.s32.totalorder %s15, 1
    %p79 = por %p77, %p78
    %p80 = scmp.ne.s32.totalorder %s69, %s70
    %p81 = scmp.eq.s32.totalorder %s15, 0
    %p82 = por %p80, %p81
    %p83 = scmp.ne.s32.totalorder %s69, %s70
    %p84 = scmp.eq.s32.totalorder %s16, 1
    %p85 = por %p83, %p84
    %p87 = scmp.ne.s32.totalorder %s70, %s86
    %p88 = scmp.eq.s32.totalorder %s16, 0
    %p89 = por %p87, %p88
    %s91 = sadd.s32 %s90, 1
    %p94 = scmp.eq.s32.totalorder %s10, 1
    %p95 = scmp.ne.s32.totalorder %s90, %s92
    %p96 = scmp.eq.s32.totalorder %s10, 0
    %p97 = por %p95, %p96
    %p98 = scmp.ne.s32.totalorder %s90, %s92
    %p99 = scmp.eq.s32.totalorder %s15, 1
    %p100 = por %p98, %p99
    %p101 = scmp.ne.s32.totalorder %s92, %s93
    %p102 = scmp.eq.s32.totalorder %s15, 0
    %p103 = por %p101, %p102
    %p104 = scmp.ne.s32.totalorder %s92, %s93
    %p105 = scmp.eq.s32.totalorder %s16, 1
    %p106 = por %p104, %p105
    %p108 = scmp.ne.s32.totalorder %s93, %s107
    %p109 = scmp.eq.s32.totalorder %s16, 0
    %p110 = por %p108, %p109
    %s112 = sadd.s32 %s111, 1
    %p115 = scmp.eq.s32.totalorder %s10, 1
    %p116 = scmp.ne.s32.totalorder %s111, %s113
    %p117 = scmp.eq.s32.totalorder %s10, 0
    %p118 = por %p116, %p117
    %p119 = scmp.ne.s32.totalorder %s111, %s113
    %p120 = scmp.eq.s32.totalorder %s15, 1
    %p121 = por %p119, %p120
    %p122 = scmp.ne.s32.totalorder %s113, %s114
    %p123 = scmp.eq.s32.totalorder %s15, 0
    %p124 = por %p122, %p123
    %p125 = scmp.ne.s32.totalorder %s113, %s114
    %p126 = scmp.eq.s32.totalorder %s16, 1
    %p127 = por %p125, %p126
    %p129 = scmp.ne.s32.totalorder %s114, %s128
    %p130 = scmp.eq.s32.totalorder %s16, 0
    %p131 = por %p129, %p130
    %s132 = ssub.s32 %s17, %s29
    %s133 = ssub.s32 %s18, %s25
    %s134 = sor.u32 %s132, %s133
    %p135 = scmp.eq.s32.totalorder %s134, 0
    %s137 = sadd.s32 %s136, 1
    %s138 = scalar_select %p135, %s136, %s137
    %p141 = pneg %p135
    %p142 = scmp.eq.s32.totalorder %s10, 1
    %p143 = por %p141, %p142
    %p144 = scmp.ne.s32.totalorder %s136, %s139
    %p145 = scmp.eq.s32.totalorder %s10, 0
    %p146 = por %p144, %p145
    %p147 = scmp.ne.s32.totalorder %s136, %s139
    %p148 = scmp.eq.s32.totalorder %s15, 1
    %p149 = por %p147, %p148
    %p150 = scmp.ne.s32.totalorder %s139, %s140
    %p151 = scmp.eq.s32.totalorder %s15, 0
    %p152 = por %p150, %p151
    %p153 = scmp.ne.s32.totalorder %s139, %s140
    %p154 = scmp.eq.s32.totalorder %s16, 1
    %p155 = por %p153, %p154
    %p157 = scmp.ne.s32.totalorder %s140, %s156
    %p158 = scmp.eq.s32.totalorder %s16, 0
    %p159 = por %p157, %p158
    %p160 = scmp.le.s32.totalorder 1, %s10
    %p161 = scmp.lt.s32.totalorder %s10, 3
    %p162 = pnand %p160, %p161
    %p163 = pneg %p162
    // Predicated region
    $region9: #{tpu_custom_call.1} parent=5 // pred_check
      _
    $region10: #{tpu_custom_call.1} parent=5 // pred_check_branch
      %165 = sbr.rel (%p162) target = $region12
    $region11: #{tpu_custom_call.1} parent=5 // pred_region
      %s166 = ssub.s32 %s10, 1
      // Predicated region
      $region13: #{tpu_custom_call.1} parent=11 // pred_check
        %p167 = pneg %p103
      $region14: #{tpu_custom_call.1} parent=11 // pred_check_branch
        %169 = sbr.rel (%p167) target = $region16
      $region15: #{tpu_custom_call.1} parent=11 // pred_region
        _
      $region16: #{tpu_custom_call.1} parent=11 // pred_fallthru
        _
      // Predicated region
      $region17: #{tpu_custom_call.1} parent=11 // pred_check
        %p170 = pneg %p124
      $region18: #{tpu_custom_call.1} parent=11 // pred_check_branch
        %172 = sbr.rel (%p170) target = $region20
      $region19: #{tpu_custom_call.1} parent=11 // pred_region
        _
      $region20: #{tpu_custom_call.1} parent=11 // pred_fallthru
        _
    $region12: #{tpu_custom_call.1} parent=5 // pred_fallthru
      _
    %p173 = scmp.lt.s32.totalorder %s10, 2
    // Predicated region
    $region21: #{tpu_custom_call.1} parent=5 // pred_check
      %p174 = pneg %p173
    $region22: #{tpu_custom_call.1} parent=5 // pred_check_branch
      %176 = sbr.rel (%p174) target = $region24
    $region23: #{tpu_custom_call.1} parent=5 // pred_region
      // Predicated region
      $region25: #{tpu_custom_call.1} parent=23 // pred_check
        %p177 = pneg %p44
      $region26: #{tpu_custom_call.1} parent=23 // pred_check_branch
        %179 = sbr.rel (%p177) target = $region28
      $region27: #{tpu_custom_call.1} parent=23 // pred_region
        %s180 = smul.u32 8, %s18
        %s181 = ssub.s32 9, %s180
        %p182 = scmp.lt.s32.totalorder %s181, 8
        %s183 = scalar_select %p182, %s181, 8
        %s184 = smul.u32 4, %s183
        %s185 = smul.u32 %s184, 2
        %s186 = smul.u32 %s185, 2
        %p187 = scmp.lt.s32.totalorder %s17, 1
        %s188 = scalar_select %p187, %s17, 1
        %p189 = scmp.lt.s32.totalorder %s180, 8
        %s190 = scalar_select %p189, %s180, 8
        %s191 = smul.addr %s190, 4
        %s192 = smul.addr %s188, 36
        %s193 = sadd.s32 %s191, %s192
        %s194 = smul.addr %s193, 4
        %s195 = scalar_lea.vmem %s0, %s194
        %s196 = smul.u32 8, %s18
        %s197 = ssub.s32 9, %s196
        %p198 = scmp.lt.s32.totalorder %s197, 8
        %s199 = scalar_select %p198, %s197, 8
        %s200 = smul.u32 4, %s199
        %s201 = smul.u32 %s200, 2
        %s202 = smul.u32 %s201, 2
      $region28: #{tpu_custom_call.1} parent=23 // pred_fallthru
        _
      // Predicated region
      $region29: #{tpu_custom_call.1} parent=23 // pred_check
        %p203 = pneg %p76
      $region30: #{tpu_custom_call.1} parent=23 // pred_check_branch
        %205 = sbr.rel (%p203) target = $region32
      $region31: #{tpu_custom_call.1} parent=23 // pred_region
        %s206 = sadd.s32 %s18, 1
        %s207 = smul.u32 %s206, 8
        %p208 = scmp.lt.s32.totalorder %s17, 1
        %s209 = scalar_select %p208, %s17, 1
        %p210 = scmp.lt.s32.totalorder %s207, 8
        %s211 = scalar_select %p210, %s207, 8
        %s212 = smul.addr %s211, 4
        %s213 = smul.addr %s209, 36
        %s214 = sadd.s32 %s212, %s213
        %s215 = smul.addr %s214, 4
        %s216 = scalar_lea.vmem %s1, %s215
        %s217 = sadd.s32 %s18, 1
        %s218 = smul.u32 %s217, 8
      $region32: #{tpu_custom_call.1} parent=23 // pred_fallthru
        _
    $region24: #{tpu_custom_call.1} parent=5 // pred_fallthru
      _
    %p219 = scmp.le.s32.totalorder 1, %s10
    %p220 = scmp.lt.s32.totalorder %s10, 3
    %p221 = pnand %p219, %p220
    %p222 = pneg %p221
    // Predicated region
    $region33: #{tpu_custom_call.1} parent=5 // pred_check
      _
    $region34: #{tpu_custom_call.1} parent=5 // pred_check_branch
      %224 = sbr.rel (%p221) target = $region36
    $region35: #{tpu_custom_call.1} parent=5 // pred_region
      %s225 = ssub.s32 %s10, 1
      %s226 = smul.u32 8, %s20
      %s227 = ssub.s32 9, %s226
      %p228 = scmp.lt.s32.totalorder %s227, 8
      %s229 = scalar_select %p228, %s227, 8
      %s230 = smul.u32 4, %s229
      %s231 = smul.u32 %s230, 2
      %s232 = smul.u32 %s231, 2
      %p233 = scmp.lt.s32.totalorder %s19, 1
      %s234 = scalar_select %p233, %s19, 1
      %p235 = scmp.lt.s32.totalorder %s226, 8
      %s236 = scalar_select %p235, %s226, 8
      %s237 = smul.addr %s236, 4
      %s238 = smul.addr %s234, 36
      %s239 = sadd.s32 %s237, %s238
      %s240 = smul.addr %s239, 4
      %s241 = scalar_lea.vmem %s0, %s240
      %p242 = pneg %p50
      %p243 = pneg %p47
      %s244 = sadd.s32 %s20, 1
      %s245 = smul.u32 %s244, 8
      %p246 = scmp.lt.s32.totalorder %s19, 1
      %s247 = scalar_select %p246, %s19, 1
      %p248 = scmp.lt.s32.totalorder %s245, 8
      %s249 = scalar_select %p248, %s245, 8
      %s250 = smul.addr %s249, 4
      %s251 = smul.addr %s247, 36
      %s252 = sadd.s32 %s250, %s251
      %s253 = smul.addr %s252, 4
      %s254 = scalar_lea.vmem %s1, %s253
      %p255 = pneg %p82
      %p256 = pneg %p79
      %p257 = pneg %p103
      %p258 = pneg %p100
      %p259 = pneg %p124
      %p260 = pneg %p121
      %p261 = pneg %p152
      %p262 = pneg %p149
      %s263 = smul.u32 8, %s20
      %p264 = scmp.lt.s32.totalorder %s19, 1
      %s265 = scalar_select %p264, %s19, 1
      %p266 = scmp.lt.s32.totalorder %s263, 7
      %s267 = scalar_select %p266, %s263, 7
      %s268 = smul.addr %s265, 8
      %s269 = sadd.s32 %s267, %s268
      %s270 = smul.addr %s269, 8
      %s271 = scalar_lea.vmem %s4, %s270
      %s272 = smul.u32 8, %s20
      %s273 = ssub.s32 9, %s272
      %p274 = scmp.lt.s32.totalorder %s273, 8
      %s275 = scalar_select %p274, %s273, 8
      %s276 = smul.u32 4, %s275
      %s277 = smul.u32 %s276, 2
      %s278 = smul.u32 %s277, 2
      %p279 = scmp.lt.s32.totalorder %s19, 1
      %s280 = scalar_select %p279, %s19, 1
      %p281 = scmp.lt.s32.totalorder %s272, 8
      %s282 = scalar_select %p281, %s272, 8
      %s283 = smul.addr %s282, 4
      %s284 = smul.addr %s280, 36
      %s285 = sadd.s32 %s283, %s284
      %s286 = smul.addr %s285, 4
      %s287 = scalar_lea.vmem %s0, %s286
      %s288 = smul.u32 8, %s20
      %s289 = ssub.s32 9, %s288
      %p290 = scmp.lt.s32.totalorder %s289, 8
      %s291 = scalar_select %p290, %s289, 8
      %s292 = smul.u32 4, %s291
      %s293 = smul.u32 %s292, 2
      %s294 = smul.u32 %s293, 2
      %s295 = sadd.s32 %s20, 1
      %s296 = smul.u32 %s295, 8
      %p297 = scmp.lt.s32.totalorder %s19, 1
      %s298 = scalar_select %p297, %s19, 1
      %p299 = scmp.lt.s32.totalorder %s296, 8
      %s300 = scalar_select %p299, %s296, 8
      %s301 = smul.addr %s300, 4
      %s302 = smul.addr %s298, 36
      %s303 = sadd.s32 %s301, %s302
      %s304 = smul.addr %s303, 4
      %s305 = scalar_lea.vmem %s1, %s304
      %s306 = sadd.s32 %s20, 1
      %s307 = smul.u32 %s306, 8
      %s308 = smul.u32 8, %s20
      %p309 = scmp.lt.s32.totalorder %s19, 1
      %s310 = scalar_select %p309, %s19, 1
      %p311 = scmp.lt.s32.totalorder %s308, 7
      %s312 = scalar_select %p311, %s308, 7
      %s313 = smul.addr %s310, 8
      %s314 = sadd.s32 %s312, %s313
      %s315 = smul.addr %s314, 8
      %s316 = scalar_lea.vmem %s4, %s315
      %s317 = smul.u32 8, %s20
      %v319 = vld [vmem:[%s287] sm:$0xf]
      %v320 = vld [vmem:[%s287 + $0x4] sm:$0x1]
      %v321 = vld [vmem:[%s287 + $0x8] sm:$0xf]
      %v322 = vld [vmem:[%s287 + $0xc] sm:$0x1]
      %v323 = vld [vmem:[%s287 + $0x10] sm:$0xf]
      %v324 = vld [vmem:[%s287 + $0x14] sm:$0x1]
      %v325 = vld [vmem:[%s287 + $0x18] sm:$0xf]
      %v326 = vld [vmem:[%s287 + $0x1c] sm:$0x1]
      %v327 = vld [vmem:[%s287 + $0x20] sm:$0xf]
      %v328 = vld [vmem:[%s287 + $0x24] sm:$0x1]
      %v329 = vld [vmem:[%s287 + $0x28] sm:$0xf]
      %v330 = vld [vmem:[%s287 + $0x2c] sm:$0x1]
      %v331 = vld [vmem:[%s287 + $0x30] sm:$0xf]
      %v332 = vld [vmem:[%s287 + $0x34] sm:$0x1]
      %v333 = vld [vmem:[%s287 + $0x38] sm:$0xf]
      %v334 = vld [vmem:[%s287 + $0x3c] sm:$0x1]
      %v335 = vld [vmem:[%s287 + $0x40] sm:$0xf]
      %v336 = vld [vmem:[%s287 + $0x44] sm:$0x1]
      %v337 = vld [vmem:[%s287 + $0x48] sm:$0xf]
      %v338 = vld [vmem:[%s287 + $0x4c] sm:$0x1]
      %v339 = vld [vmem:[%s287 + $0x50] sm:$0xf]
      %v340 = vld [vmem:[%s287 + $0x54] sm:$0x1]
      %v341 = vld [vmem:[%s287 + $0x58] sm:$0xf]
      %v342 = vld [vmem:[%s287 + $0x5c] sm:$0x1]
      %v343 = vld [vmem:[%s287 + $0x60] sm:$0xf]
      %v344 = vld [vmem:[%s287 + $0x64] sm:$0x1]
      %v345 = vld [vmem:[%s287 + $0x68] sm:$0xf]
      %v346 = vld [vmem:[%s287 + $0x6c] sm:$0x1]
      %v347 = vld [vmem:[%s287 + $0x70] sm:$0xf]
      %v348 = vld [vmem:[%s287 + $0x74] sm:$0x1]
      %v349 = vld [vmem:[%s287 + $0x78] sm:$0xf]
      %v350 = vld [vmem:[%s287 + $0x7c] sm:$0x1]
      %v351 = vld [vmem:[%s305] sm:$0xf]
      %v352 = vld [vmem:[%s305 + $0x4] sm:$0x1]
      %v353 = vld [vmem:[%s2] sm:$0x3]
      %s354 = scalar_lea.vmem %s2, 2
      %v355 = vld [vmem:[%s354] sm:$0x3]
      %v364 = vunpack.c.l.b16 %v319
      %v365 = vunpack.c.l.b16 %v323
      %v366 = vunpack.c.l.b16 %v327
      %v367 = vunpack.c.l.b16 %v331
      %v368 = vunpack.c.l.b16 %v335
      %v369 = vunpack.c.l.b16 %v339
      %v370 = vunpack.c.l.b16 %v343
      %v371 = vunpack.c.l.b16 %v347
      %v372 = vpack.c.b16 %v365, %v364
      %v373 = vpack.c.b16 %v367, %v366
      %v374 = vpack.c.b16 %v369, %v368
      %v375 = vpack.c.b16 %v371, %v370
      %376 = vrot.lane.b32.xlu0 %v372, 124
      %v377 = vpop.permute.xlu0 %376
      %378 = vrot.lane.b32.xlu0 %v373, 124
      %v379 = vpop.permute.xlu0 %378
      %380 = vrot.lane.b32.xlu0 %v374, 124
      %v381 = vpop.permute.xlu0 %380
      %382 = vrot.lane.b32.xlu0 %v375, 124
      %v383 = vpop.permute.xlu0 %382
      %vm384 = vcmask 31744
      %v386 = vsel %vm384, %v377, 0
      %v389 = vsel %vm384, %v379, 0
      %v392 = vsel %vm384, %v381, 0
      %v395 = vsel %vm384, %v383, 0
      %vm397 = vcmask 1041408
      %v399 = vsel %vm397, %v355, 0
      %401 = vmatpush.bf16.msra.mxu0 0
      %402 = vmatpush.bf16.msra.mxu0 0
      %403 = vmatpush.bf16.msra.mxu0 0
      %404 = vmatpush.bf16.msra.mxu0 0
      %405 = vmatpush.bf16.msra.mxu0 0
      %406 = vmatpush.bf16.msra.mxu0 0
      %407 = vmatpush.bf16.msra.mxu0 0
      %408 = vmatpush.bf16.msra.mxu0 %v399
      %409 = vmatmul.bf16.gmra.mxu0 %v386
      %v410 = vpop.f32.mrf.mxu0
      %v411 = vadd.f32 0.0, %v410
      %v412 = vpop.f32.mrf.mxu0
      %v413 = vadd.f32 0.0, %v412
      %414 = vmatmul.bf16.gmra.mxu0 %v389
      %v415 = vpop.f32.mrf.mxu0
      %v416 = vadd.f32 0.0, %v415
      %v417 = vpop.f32.mrf.mxu0
      %v418 = vadd.f32 0.0, %v417
      %419 = vmatmul.bf16.gmra.mxu0 %v392
      %v420 = vpop.f32.mrf.mxu0
      %v421 = vadd.f32 0.0, %v420
      %v422 = vpop.f32.mrf.mxu0
      %v423 = vadd.f32 0.0, %v422
      %424 = vmatmul.bf16.gmra.mxu0 %v395
      %v425 = vpop.f32.mrf.mxu0
      %v426 = vadd.f32 0.0, %v425
      %v427 = vpop.f32.mrf.mxu0
      %v428 = vadd.f32 0.0, %v427
      %429 = vdwg.mxu0
      %v431 = vsel %vm384, %v372, 0
      %v434 = vsel %vm384, %v373, 0
      %v437 = vsel %vm384, %v374, 0
      %v440 = vsel %vm384, %v375, 0
      %v443 = vsel %vm397, %v353, 0
      %445 = vmatpush.bf16.msra.mxu0 0
      %446 = vmatpush.bf16.msra.mxu0 0
      %447 = vmatpush.bf16.msra.mxu0 0
      %448 = vmatpush.bf16.msra.mxu0 0
      %449 = vmatpush.bf16.msra.mxu0 0
      %450 = vmatpush.bf16.msra.mxu0 0
      %451 = vmatpush.bf16.msra.mxu0 0
      %452 = vmatpush.bf16.msra.mxu0 %v443
      %453 = vmatmul.bf16.gmra.mxu0 %v431
      %v454 = vpop.f32.mrf.mxu0
      %v455 = vadd.f32 %v411, %v454
      %v456 = vpop.f32.mrf.mxu0
      %v457 = vadd.f32 %v413, %v456
      %458 = vmatmul.bf16.gmra.mxu0 %v434
      %v459 = vpop.f32.mrf.mxu0
      %v460 = vadd.f32 %v416, %v459
      %v461 = vpop.f32.mrf.mxu0
      %v462 = vadd.f32 %v418, %v461
      %463 = vmatmul.bf16.gmra.mxu0 %v437
      %v464 = vpop.f32.mrf.mxu0
      %v465 = vadd.f32 %v421, %v464
      %v466 = vpop.f32.mrf.mxu0
      %v467 = vadd.f32 %v423, %v466
      %468 = vmatmul.bf16.gmra.mxu0 %v440
      %v469 = vpop.f32.mrf.mxu0
      %v470 = vadd.f32 %v426, %v469
      %v471 = vpop.f32.mrf.mxu0
      %v472 = vadd.f32 %v428, %v471
      %473 = vdwg.mxu0
      %vm474 = vsmask.f32 3328
      %vm475 = vsmask.f32 7440
      %vm476 = vmor %vm474, %vm475
      %v478 = vshrl.u32 %v319, 16
      %v480 = vrot.slane %v478, 4
      %v481 = vshll.u32 %v319, 16
      %v483 = vrot.slane %v481, 5
      %v484 = vor.u32 %v480, %v483
      %v485 = vrot.slane %v484, 4
      %v487 = vshll.u32 %v320, 16
      %v489 = vrot.slane %v487, 5
      %v490 = vsel %vm476, %v485, %v489
      %v492 = vshrl.u32 %v323, 16
      %v494 = vrot.slane %v492, 4
      %v495 = vshll.u32 %v323, 16
      %v497 = vrot.slane %v495, 5
      %v498 = vor.u32 %v494, %v497
      %v499 = vrot.slane %v498, 4
      %v501 = vshll.u32 %v324, 16
      %v503 = vrot.slane %v501, 5
      %v504 = vsel %vm476, %v499, %v503
      %v506 = vshrl.u32 %v327, 16
      %v508 = vrot.slane %v506, 4
      %v509 = vshll.u32 %v327, 16
      %v511 = vrot.slane %v509, 5
      %v512 = vor.u32 %v508, %v511
      %v513 = vrot.slane %v512, 4
      %v515 = vshll.u32 %v328, 16
      %v517 = vrot.slane %v515, 5
      %v518 = vsel %vm476, %v513, %v517
      %v520 = vshrl.u32 %v331, 16
      %v522 = vrot.slane %v520, 4
      %v523 = vshll.u32 %v331, 16
      %v525 = vrot.slane %v523, 5
      %v526 = vor.u32 %v522, %v525
      %v527 = vrot.slane %v526, 4
      %v529 = vshll.u32 %v332, 16
      %v531 = vrot.slane %v529, 5
      %v532 = vsel %vm476, %v527, %v531
      %v534 = vshrl.u32 %v335, 16
      %v536 = vrot.slane %v534, 4
      %v537 = vshll.u32 %v335, 16
      %v539 = vrot.slane %v537, 5
      %v540 = vor.u32 %v536, %v539
      %v541 = vrot.slane %v540, 4
      %v543 = vshll.u32 %v336, 16
      %v545 = vrot.slane %v543, 5
      %v546 = vsel %vm476, %v541, %v545
      %v548 = vshrl.u32 %v339, 16
      %v550 = vrot.slane %v548, 4
      %v551 = vshll.u32 %v339, 16
      %v553 = vrot.slane %v551, 5
      %v554 = vor.u32 %v550, %v553
      %v555 = vrot.slane %v554, 4
      %v557 = vshll.u32 %v340, 16
      %v559 = vrot.slane %v557, 5
      %v560 = vsel %vm476, %v555, %v559
      %v562 = vshrl.u32 %v343, 16
      %v564 = vrot.slane %v562, 4
      %v565 = vshll.u32 %v343, 16
      %v567 = vrot.slane %v565, 5
      %v568 = vor.u32 %v564, %v567
      %v569 = vrot.slane %v568, 4
      %v571 = vshll.u32 %v344, 16
      %v573 = vrot.slane %v571, 5
      %v574 = vsel %vm476, %v569, %v573
      %v576 = vshrl.u32 %v347, 16
      %v578 = vrot.slane %v576, 4
      %v579 = vshll.u32 %v347, 16
      %v581 = vrot.slane %v579, 5
      %v582 = vor.u32 %v578, %v581
      %v583 = vrot.slane %v582, 4
      %v585 = vshll.u32 %v348, 16
      %v587 = vrot.slane %v585, 5
      %v588 = vsel %vm476, %v583, %v587
      %s589 = scalar_lea.vmem %s2, 4
      %v590 = vld [vmem:[%s589] sm:$0x3]
      %v591 = vunpack.c.l.b16 %v490
      %v592 = vunpack.c.l.b16 %v504
      %v593 = vunpack.c.l.b16 %v518
      %v594 = vunpack.c.l.b16 %v532
      %v595 = vunpack.c.l.b16 %v546
      %v596 = vunpack.c.l.b16 %v560
      %v597 = vunpack.c.l.b16 %v574
      %v598 = vunpack.c.l.b16 %v588
      %v599 = vpack.c.b16 %v592, %v591
      %v600 = vpack.c.b16 %v594, %v593
      %v601 = vpack.c.b16 %v596, %v595
      %v602 = vpack.c.b16 %v598, %v597
      %v604 = vsel %vm384, %v599, 0
      %v607 = vsel %vm384, %v600, 0
      %v610 = vsel %vm384, %v601, 0
      %v613 = vsel %vm384, %v602, 0
      %v616 = vsel %vm397, %v590, 0
      %618 = vmatpush.bf16.msra.mxu0 0
      %619 = vmatpush.bf16.msra.mxu0 0
      %620 = vmatpush.bf16.msra.mxu0 0
      %621 = vmatpush.bf16.msra.mxu0 0
      %622 = vmatpush.bf16.msra.mxu0 0
      %623 = vmatpush.bf16.msra.mxu0 0
      %624 = vmatpush.bf16.msra.mxu0 0
      %625 = vmatpush.bf16.msra.mxu0 %v616
      %626 = vmatmul.bf16.gmra.mxu0 %v604
      %v627 = vpop.f32.mrf.mxu0
      %v628 = vadd.f32 0.0, %v627
      %v629 = vpop.f32.mrf.mxu0
      %v630 = vadd.f32 0.0, %v629
      %631 = vmatmul.bf16.gmra.mxu0 %v607
      %v632 = vpop.f32.mrf.mxu0
      %v633 = vadd.f32 0.0, %v632
      %v634 = vpop.f32.mrf.mxu0
      %v635 = vadd.f32 0.0, %v634
      %636 = vmatmul.bf16.gmra.mxu0 %v610
      %v637 = vpop.f32.mrf.mxu0
      %v638 = vadd.f32 0.0, %v637
      %v639 = vpop.f32.mrf.mxu0
      %v640 = vadd.f32 0.0, %v639
      %641 = vmatmul.bf16.gmra.mxu0 %v613
      %v642 = vpop.f32.mrf.mxu0
      %v643 = vadd.f32 0.0, %v642
      %v644 = vpop.f32.mrf.mxu0
      %v645 = vadd.f32 0.0, %v644
      %646 = vdwg.mxu0
      %v647 = vadd.f32 %v455, %v628
      %v648 = vadd.f32 %v457, %v630
      %v649 = vadd.f32 %v460, %v633
      %v650 = vadd.f32 %v462, %v635
      %v651 = vadd.f32 %v465, %v638
      %v652 = vadd.f32 %v467, %v640
      %v653 = vadd.f32 %v470, %v643
      %v654 = vadd.f32 %v472, %v645
      %s655 = scalar_lea.vmem %s2, 6
      %v656 = vld [vmem:[%s655] sm:$0x3]
      %v665 = vunpack.c.l.b16 %v321
      %v666 = vunpack.c.l.b16 %v325
      %v667 = vunpack.c.l.b16 %v329
      %v668 = vunpack.c.l.b16 %v333
      %v669 = vunpack.c.l.b16 %v337
      %v670 = vunpack.c.l.b16 %v341
      %v671 = vunpack.c.l.b16 %v345
      %v672 = vunpack.c.l.b16 %v349
      %v673 = vpack.c.b16 %v666, %v665
      %v674 = vpack.c.b16 %v668, %v667
      %v675 = vpack.c.b16 %v670, %v669
      %v676 = vpack.c.b16 %v672, %v671
      %v678 = vsel %vm384, %v673, 0
      %v681 = vsel %vm384, %v674, 0
      %v684 = vsel %vm384, %v675, 0
      %v687 = vsel %vm384, %v676, 0
      %v690 = vsel %vm397, %v656, 0
      %692 = vmatpush.bf16.msra.mxu0 0
      %693 = vmatpush.bf16.msra.mxu0 0
      %694 = vmatpush.bf16.msra.mxu0 0
      %695 = vmatpush.bf16.msra.mxu0 0
      %696 = vmatpush.bf16.msra.mxu0 0
      %697 = vmatpush.bf16.msra.mxu0 0
      %698 = vmatpush.bf16.msra.mxu0 0
      %699 = vmatpush.bf16.msra.mxu0 %v690
      %700 = vmatmul.bf16.gmra.mxu0 %v678
      %v701 = vpop.f32.mrf.mxu0
      %v702 = vadd.f32 0.0, %v701
      %v703 = vpop.f32.mrf.mxu0
      %v704 = vadd.f32 0.0, %v703
      %705 = vmatmul.bf16.gmra.mxu0 %v681
      %v706 = vpop.f32.mrf.mxu0
      %v707 = vadd.f32 0.0, %v706
      %v708 = vpop.f32.mrf.mxu0
      %v709 = vadd.f32 0.0, %v708
      %710 = vmatmul.bf16.gmra.mxu0 %v684
      %v711 = vpop.f32.mrf.mxu0
      %v712 = vadd.f32 0.0, %v711
      %v713 = vpop.f32.mrf.mxu0
      %v714 = vadd.f32 0.0, %v713
      %715 = vmatmul.bf16.gmra.mxu0 %v687
      %v716 = vpop.f32.mrf.mxu0
      %v717 = vadd.f32 0.0, %v716
      %v718 = vpop.f32.mrf.mxu0
      %v719 = vadd.f32 0.0, %v718
      %720 = vdwg.mxu0
      %v721 = vadd.f32 %v647, %v702
      %v722 = vadd.f32 %v648, %v704
      %v723 = vadd.f32 %v649, %v707
      %v724 = vadd.f32 %v650, %v709
      %v725 = vadd.f32 %v651, %v712
      %v726 = vadd.f32 %v652, %v714
      %v727 = vadd.f32 %v653, %v717
      %v728 = vadd.f32 %v654, %v719
      %s729 = scalar_lea.vmem %s2, 8
      %v730 = vld [vmem:[%s729] sm:$0x3]
      %731 = vrot.lane.b32.xlu0 %v673, 124
      %v732 = vpop.permute.xlu0 %731
      %733 = vrot.lane.b32.xlu0 %v674, 124
      %v734 = vpop.permute.xlu0 %733
      %735 = vrot.lane.b32.xlu0 %v675, 124
      %v736 = vpop.permute.xlu0 %735
      %737 = vrot.lane.b32.xlu0 %v676, 124
      %v738 = vpop.permute.xlu0 %737
      %v740 = vsel %vm384, %v732, 0
      %v743 = vsel %vm384, %v734, 0
      %v746 = vsel %vm384, %v736, 0
      %v749 = vsel %vm384, %v738, 0
      %v752 = vsel %vm397, %v730, 0
      %754 = vmatpush.bf16.msra.mxu0 0
      %755 = vmatpush.bf16.msra.mxu0 0
      %756 = vmatpush.bf16.msra.mxu0 0
      %757 = vmatpush.bf16.msra.mxu0 0
      %758 = vmatpush.bf16.msra.mxu0 0
      %759 = vmatpush.bf16.msra.mxu0 0
      %760 = vmatpush.bf16.msra.mxu0 0
      %761 = vmatpush.bf16.msra.mxu0 %v752
      %762 = vmatmul.bf16.gmra.mxu0 %v740
      %v763 = vpop.f32.mrf.mxu0
      %v764 = vadd.f32 0.0, %v763
      %v765 = vpop.f32.mrf.mxu0
      %v766 = vadd.f32 0.0, %v765
      %767 = vmatmul.bf16.gmra.mxu0 %v743
      %v768 = vpop.f32.mrf.mxu0
      %v769 = vadd.f32 0.0, %v768
      %v770 = vpop.f32.mrf.mxu0
      %v771 = vadd.f32 0.0, %v770
      %772 = vmatmul.bf16.gmra.mxu0 %v746
      %v773 = vpop.f32.mrf.mxu0
      %v774 = vadd.f32 0.0, %v773
      %v775 = vpop.f32.mrf.mxu0
      %v776 = vadd.f32 0.0, %v775
      %777 = vmatmul.bf16.gmra.mxu0 %v749
      %v778 = vpop.f32.mrf.mxu0
      %v779 = vadd.f32 0.0, %v778
      %v780 = vpop.f32.mrf.mxu0
      %v781 = vadd.f32 0.0, %v780
      %782 = vdwg.mxu0
      %v783 = vadd.f32 %v721, %v764
      %v784 = vadd.f32 %v722, %v766
      %v785 = vadd.f32 %v723, %v769
      %v786 = vadd.f32 %v724, %v771
      %v787 = vadd.f32 %v725, %v774
      %v788 = vadd.f32 %v726, %v776
      %v789 = vadd.f32 %v727, %v779
      %v790 = vadd.f32 %v728, %v781
      %v792 = vshrl.u32 %v321, 16
      %v794 = vrot.slane %v792, 4
      %v795 = vshll.u32 %v321, 16
      %v797 = vrot.slane %v795, 5
      %v798 = vor.u32 %v794, %v797
      %v799 = vrot.slane %v798, 4
      %v801 = vshll.u32 %v322, 16
      %v803 = vrot.slane %v801, 5
      %v804 = vsel %vm476, %v799, %v803
      %v806 = vshrl.u32 %v325, 16
      %v808 = vrot.slane %v806, 4
      %v809 = vshll.u32 %v325, 16
      %v811 = vrot.slane %v809, 5
      %v812 = vor.u32 %v808, %v811
      %v813 = vrot.slane %v812, 4
      %v815 = vshll.u32 %v326, 16
      %v817 = vrot.slane %v815, 5
      %v818 = vsel %vm476, %v813, %v817
      %v820 = vshrl.u32 %v329, 16
      %v822 = vrot.slane %v820, 4
      %v823 = vshll.u32 %v329, 16
      %v825 = vrot.slane %v823, 5
      %v826 = vor.u32 %v822, %v825
      %v827 = vrot.slane %v826, 4
      %v829 = vshll.u32 %v330, 16
      %v831 = vrot.slane %v829, 5
      %v832 = vsel %vm476, %v827, %v831
      %v834 = vshrl.u32 %v333, 16
      %v836 = vrot.slane %v834, 4
      %v837 = vshll.u32 %v333, 16
      %v839 = vrot.slane %v837, 5
      %v840 = vor.u32 %v836, %v839
      %v841 = vrot.slane %v840, 4
      %v843 = vshll.u32 %v334, 16
      %v845 = vrot.slane %v843, 5
      %v846 = vsel %vm476, %v841, %v845
      %v848 = vshrl.u32 %v337, 16
      %v850 = vrot.slane %v848, 4
      %v851 = vshll.u32 %v337, 16
      %v853 = vrot.slane %v851, 5
      %v854 = vor.u32 %v850, %v853
      %v855 = vrot.slane %v854, 4
      %v857 = vshll.u32 %v338, 16
      %v859 = vrot.slane %v857, 5
      %v860 = vsel %vm476, %v855, %v859
      %v862 = vshrl.u32 %v341, 16
      %v864 = vrot.slane %v862, 4
      %v865 = vshll.u32 %v341, 16
      %v867 = vrot.slane %v865, 5
      %v868 = vor.u32 %v864, %v867
      %v869 = vrot.slane %v868, 4
      %v871 = vshll.u32 %v342, 16
      %v873 = vrot.slane %v871, 5
      %v874 = vsel %vm476, %v869, %v873
      %v876 = vshrl.u32 %v345, 16
      %v878 = vrot.slane %v876, 4
      %v879 = vshll.u32 %v345, 16
      %v881 = vrot.slane %v879, 5
      %v882 = vor.u32 %v878, %v881
      %v883 = vrot.slane %v882, 4
      %v885 = vshll.u32 %v346, 16
      %v887 = vrot.slane %v885, 5
      %v888 = vsel %vm476, %v883, %v887
      %v890 = vshrl.u32 %v349, 16
      %v892 = vrot.slane %v890, 4
      %v893 = vshll.u32 %v349, 16
      %v895 = vrot.slane %v893, 5
      %v896 = vor.u32 %v892, %v895
      %v897 = vrot.slane %v896, 4
      %v899 = vshll.u32 %v350, 16
      %v901 = vrot.slane %v899, 5
      %v902 = vsel %vm476, %v897, %v901
      %s903 = scalar_lea.vmem %s2, 10
      %v904 = vld [vmem:[%s903] sm:$0x3]
      %v905 = vunpack.c.l.b16 %v804
      %v906 = vunpack.c.l.b16 %v818
      %v907 = vunpack.c.l.b16 %v832
      %v908 = vunpack.c.l.b16 %v846
      %v909 = vunpack.c.l.b16 %v860
      %v910 = vunpack.c.l.b16 %v874
      %v911 = vunpack.c.l.b16 %v888
      %v912 = vunpack.c.l.b16 %v902
      %v913 = vpack.c.b16 %v906, %v905
      %v914 = vpack.c.b16 %v908, %v907
      %v915 = vpack.c.b16 %v910, %v909
      %v916 = vpack.c.b16 %v912, %v911
      %v918 = vsel %vm384, %v913, 0
      %v921 = vsel %vm384, %v914, 0
      %v924 = vsel %vm384, %v915, 0
      %v927 = vsel %vm384, %v916, 0
      %v930 = vsel %vm397, %v904, 0
      %932 = vmatpush.bf16.msra.mxu0 0
      %933 = vmatpush.bf16.msra.mxu0 0
      %934 = vmatpush.bf16.msra.mxu0 0
      %935 = vmatpush.bf16.msra.mxu0 0
      %936 = vmatpush.bf16.msra.mxu0 0
      %937 = vmatpush.bf16.msra.mxu0 0
      %938 = vmatpush.bf16.msra.mxu0 0
      %939 = vmatpush.bf16.msra.mxu0 %v930
      %940 = vmatmul.bf16.gmra.mxu0 %v918
      %v941 = vpop.f32.mrf.mxu0
      %v942 = vadd.f32 0.0, %v941
      %v943 = vpop.f32.mrf.mxu0
      %v944 = vadd.f32 0.0, %v943
      %945 = vmatmul.bf16.gmra.mxu0 %v921
      %v946 = vpop.f32.mrf.mxu0
      %v947 = vadd.f32 0.0, %v946
      %v948 = vpop.f32.mrf.mxu0
      %v949 = vadd.f32 0.0, %v948
      %950 = vmatmul.bf16.gmra.mxu0 %v924
      %v951 = vpop.f32.mrf.mxu0
      %v952 = vadd.f32 0.0, %v951
      %v953 = vpop.f32.mrf.mxu0
      %v954 = vadd.f32 0.0, %v953
      %955 = vmatmul.bf16.gmra.mxu0 %v927
      %v956 = vpop.f32.mrf.mxu0
      %v957 = vadd.f32 0.0, %v956
      %v958 = vpop.f32.mrf.mxu0
      %v959 = vadd.f32 0.0, %v958
      %960 = vdwg.mxu0
      %v961 = vadd.f32 %v783, %v942
      %v962 = vadd.f32 %v784, %v944
      %v963 = vadd.f32 %v785, %v947
      %v964 = vadd.f32 %v786, %v949
      %v965 = vadd.f32 %v787, %v952
      %v966 = vadd.f32 %v788, %v954
      %v967 = vadd.f32 %v789, %v957
      %v968 = vadd.f32 %v790, %v959
      %s969 = scalar_lea.vmem %s2, 12
      %v970 = vld [vmem:[%s969] sm:$0x3]
      %v972 = vunpack.c.l.b16 %v351
      %v973 = vpack.c.b16 %v366, %v365
      %v974 = vpack.c.b16 %v368, %v367
      %v975 = vpack.c.b16 %v370, %v369
      %v976 = vpack.c.b16 %v972, %v371
      %v978 = vsel %vm384, %v973, 0
      %v981 = vsel %vm384, %v974, 0
      %v984 = vsel %vm384, %v975, 0
      %v987 = vsel %vm384, %v976, 0
      %v990 = vsel %vm397, %v970, 0
      %992 = vmatpush.bf16.msra.mxu0 0
      %993 = vmatpush.bf16.msra.mxu0 0
      %994 = vmatpush.bf16.msra.mxu0 0
      %995 = vmatpush.bf16.msra.mxu0 0
      %996 = vmatpush.bf16.msra.mxu0 0
      %997 = vmatpush.bf16.msra.mxu0 0
      %998 = vmatpush.bf16.msra.mxu0 0
      %999 = vmatpush.bf16.msra.mxu0 %v990
      %1000 = vmatmul.bf16.gmra.mxu0 %v978
      %v1001 = vpop.f32.mrf.mxu0
      %v1002 = vadd.f32 0.0, %v1001
      %v1003 = vpop.f32.mrf.mxu0
      %v1004 = vadd.f32 0.0, %v1003
      %1005 = vmatmul.bf16.gmra.mxu0 %v981
      %v1006 = vpop.f32.mrf.mxu0
      %v1007 = vadd.f32 0.0, %v1006
      %v1008 = vpop.f32.mrf.mxu0
      %v1009 = vadd.f32 0.0, %v1008
      %1010 = vmatmul.bf16.gmra.mxu0 %v984
      %v1011 = vpop.f32.mrf.mxu0
      %v1012 = vadd.f32 0.0, %v1011
      %v1013 = vpop.f32.mrf.mxu0
      %v1014 = vadd.f32 0.0, %v1013
      %1015 = vmatmul.bf16.gmra.mxu0 %v987
      %v1016 = vpop.f32.mrf.mxu0
      %v1017 = vadd.f32 0.0, %v1016
      %v1018 = vpop.f32.mrf.mxu0
      %v1019 = vadd.f32 0.0, %v1018
      %1020 = vdwg.mxu0
      %v1021 = vadd.f32 %v961, %v1002
      %v1022 = vadd.f32 %v962, %v1004
      %v1023 = vadd.f32 %v963, %v1007
      %v1024 = vadd.f32 %v964, %v1009
      %v1025 = vadd.f32 %v965, %v1012
      %v1026 = vadd.f32 %v966, %v1014
      %v1027 = vadd.f32 %v967, %v1017
      %v1028 = vadd.f32 %v968, %v1019
      %s1029 = scalar_lea.vmem %s2, 14
      %v1030 = vld [vmem:[%s1029] sm:$0x3]
      %1031 = vrot.lane.b32.xlu0 %v973, 124
      %v1032 = vpop.permute.xlu0 %1031
      %1033 = vrot.lane.b32.xlu0 %v974, 124
      %v1034 = vpop.permute.xlu0 %1033
      %1035 = vrot.lane.b32.xlu0 %v975, 124
      %v1036 = vpop.permute.xlu0 %1035
      %1037 = vrot.lane.b32.xlu0 %v976, 124
      %v1038 = vpop.permute.xlu0 %1037
      %v1040 = vsel %vm384, %v1032, 0
      %v1043 = vsel %vm384, %v1034, 0
      %v1046 = vsel %vm384, %v1036, 0
      %v1049 = vsel %vm384, %v1038, 0
      %v1052 = vsel %vm397, %v1030, 0
      %1054 = vmatpush.bf16.msra.mxu0 0
      %1055 = vmatpush.bf16.msra.mxu0 0
      %1056 = vmatpush.bf16.msra.mxu0 0
      %1057 = vmatpush.bf16.msra.mxu0 0
      %1058 = vmatpush.bf16.msra.mxu0 0
      %1059 = vmatpush.bf16.msra.mxu0 0
      %1060 = vmatpush.bf16.msra.mxu0 0
      %1061 = vmatpush.bf16.msra.mxu0 %v1052
      %1062 = vmatmul.bf16.gmra.mxu0 %v1040
      %v1063 = vpop.f32.mrf.mxu0
      %v1064 = vadd.f32 0.0, %v1063
      %v1065 = vpop.f32.mrf.mxu0
      %v1066 = vadd.f32 0.0, %v1065
      %1067 = vmatmul.bf16.gmra.mxu0 %v1043
      %v1068 = vpop.f32.mrf.mxu0
      %v1069 = vadd.f32 0.0, %v1068
      %v1070 = vpop.f32.mrf.mxu0
      %v1071 = vadd.f32 0.0, %v1070
      %1072 = vmatmul.bf16.gmra.mxu0 %v1046
      %v1073 = vpop.f32.mrf.mxu0
      %v1074 = vadd.f32 0.0, %v1073
      %v1075 = vpop.f32.mrf.mxu0
      %v1076 = vadd.f32 0.0, %v1075
      %1077 = vmatmul.bf16.gmra.mxu0 %v1049
      %v1078 = vpop.f32.mrf.mxu0
      %v1079 = vadd.f32 0.0, %v1078
      %v1080 = vpop.f32.mrf.mxu0
      %v1081 = vadd.f32 0.0, %v1080
      %1082 = vdwg.mxu0
      %v1083 = vadd.f32 %v1021, %v1064
      %v1084 = vadd.f32 %v1022, %v1066
      %v1085 = vadd.f32 %v1023, %v1069
      %v1086 = vadd.f32 %v1024, %v1071
      %v1087 = vadd.f32 %v1025, %v1074
      %v1088 = vadd.f32 %v1026, %v1076
      %v1089 = vadd.f32 %v1027, %v1079
      %v1090 = vadd.f32 %v1028, %v1081
      %v1092 = vshrl.u32 %v351, 16
      %v1094 = vrot.slane %v1092, 4
      %v1095 = vshll.u32 %v351, 16
      %v1097 = vrot.slane %v1095, 5
      %v1098 = vor.u32 %v1094, %v1097
      %v1099 = vrot.slane %v1098, 4
      %v1101 = vshll.u32 %v352, 16
      %v1103 = vrot.slane %v1101, 5
      %v1104 = vsel %vm476, %v1099, %v1103
      %s1105 = scalar_lea.vmem %s2, 16
      %v1106 = vld [vmem:[%s1105] sm:$0x3]
      %v1107 = vunpack.c.l.b16 %v1104
      %v1108 = vpack.c.b16 %v593, %v592
      %v1109 = vpack.c.b16 %v595, %v594
      %v1110 = vpack.c.b16 %v597, %v596
      %v1111 = vpack.c.b16 %v1107, %v598
      %v1113 = vsel %vm384, %v1108, 0
      %v1116 = vsel %vm384, %v1109, 0
      %v1119 = vsel %vm384, %v1110, 0
      %v1122 = vsel %vm384, %v1111, 0
      %v1125 = vsel %vm397, %v1106, 0
      %1127 = vmatpush.bf16.msra.mxu0 0
      %1128 = vmatpush.bf16.msra.mxu0 0
      %1129 = vmatpush.bf16.msra.mxu0 0
      %1130 = vmatpush.bf16.msra.mxu0 0
      %1131 = vmatpush.bf16.msra.mxu0 0
      %1132 = vmatpush.bf16.msra.mxu0 0
      %1133 = vmatpush.bf16.msra.mxu0 0
      %1134 = vmatpush.bf16.msra.mxu0 %v1125
      %1135 = vmatmul.bf16.gmra.mxu0 %v1113
      %v1136 = vpop.f32.mrf.mxu0
      %v1137 = vadd.f32 0.0, %v1136
      %v1138 = vpop.f32.mrf.mxu0
      %v1139 = vadd.f32 0.0, %v1138
      %1140 = vmatmul.bf16.gmra.mxu0 %v1116
      %v1141 = vpop.f32.mrf.mxu0
      %v1142 = vadd.f32 0.0, %v1141
      %v1143 = vpop.f32.mrf.mxu0
      %v1144 = vadd.f32 0.0, %v1143
      %1145 = vmatmul.bf16.gmra.mxu0 %v1119
      %v1146 = vpop.f32.mrf.mxu0
      %v1147 = vadd.f32 0.0, %v1146
      %v1148 = vpop.f32.mrf.mxu0
      %v1149 = vadd.f32 0.0, %v1148
      %1150 = vmatmul.bf16.gmra.mxu0 %v1122
      %v1151 = vpop.f32.mrf.mxu0
      %v1152 = vadd.f32 0.0, %v1151
      %v1153 = vpop.f32.mrf.mxu0
      %v1154 = vadd.f32 0.0, %v1153
      %1155 = vdwg.mxu0
      %v1156 = vadd.f32 %v1083, %v1137
      %v1157 = vadd.f32 %v1084, %v1139
      %v1158 = vadd.f32 %v1085, %v1142
      %v1159 = vadd.f32 %v1086, %v1144
      %v1160 = vadd.f32 %v1087, %v1147
      %v1161 = vadd.f32 %v1088, %v1149
      %v1162 = vadd.f32 %v1089, %v1152
      %v1163 = vadd.f32 %v1090, %v1154
      %v1164 = vld [vmem:[%s3] sm:$0x1]
      %v1166 = vperm.slane %v1164, 0
      %v1168 = vadd.f32 %v1156, %v1166
      %v1169 = vadd.f32 %v1157, %v1166
      %v1170 = vadd.f32 %v1158, %v1166
      %v1171 = vadd.f32 %v1159, %v1166
      %v1172 = vadd.f32 %v1160, %v1166
      %v1173 = vadd.f32 %v1161, %v1166
      %v1174 = vadd.f32 %v1162, %v1166
      %v1175 = vadd.f32 %v1163, %v1166
      %vm1176 = vcmask 64512
      %1177 = vst.msk [vmem:[%s316] sm:$0xff] %vm1176, %v1168
      %1178 = vst.msk [vmem:[%s316 + $0x8] sm:$0xff] %vm1176, %v1169
      %1179 = vst.msk [vmem:[%s316 + $0x10] sm:$0xff] %vm1176, %v1170
      %1180 = vst.msk [vmem:[%s316 + $0x18] sm:$0xff] %vm1176, %v1171
      %1181 = vst.msk [vmem:[%s316 + $0x20] sm:$0xff] %vm1176, %v1172
      %1182 = vst.msk [vmem:[%s316 + $0x28] sm:$0xff] %vm1176, %v1173
      %1183 = vst.msk [vmem:[%s316 + $0x30] sm:$0xff] %vm1176, %v1174
      %1184 = vst.msk [vmem:[%s316 + $0x38] sm:$0xff] %vm1176, %v1175
      %s1185 = smul.u32 8, %s20
      %p1186 = scmp.lt.s32.totalorder %s19, 1
      %s1187 = scalar_select %p1186, %s19, 1
      %p1188 = scmp.lt.s32.totalorder %s1185, 7
      %s1189 = scalar_select %p1188, %s1185, 7
      %s1190 = smul.addr %s1187, 8
      %s1191 = sadd.s32 %s1189, %s1190
      %s1192 = smul.addr %s1191, 8
      %s1193 = scalar_lea.vmem %s4, %s1192
      // Predicated region
      $region37: #{tpu_custom_call.1} parent=35 // pred_check
        %p1194 = pneg %p149
      $region38: #{tpu_custom_call.1} parent=35 // pred_check_branch
        %1196 = sbr.rel (%p1194) target = $region40
      $region39: #{tpu_custom_call.1} parent=35 // pred_region
        %s1197 = smul.u32 8, %s20
      $region40: #{tpu_custom_call.1} parent=35 // pred_fallthru
        _
    $region36: #{tpu_custom_call.1} parent=5 // pred_fallthru
      _
    %p1198 = scmp.le.s32.totalorder 2, %s10
    // Predicated region
    $region41: #{tpu_custom_call.1} parent=5 // pred_check
      %p1199 = pneg %p1198
    $region42: #{tpu_custom_call.1} parent=5 // pred_check_branch
      %1201 = sbr.rel (%p1199) target = $region44
    $region43: #{tpu_custom_call.1} parent=5 // pred_region
      %s1202 = ssub.s32 %s10, 2
      // Predicated region
      $region45: #{tpu_custom_call.1} parent=43 // pred_check
        %p1203 = pneg %p155
      $region46: #{tpu_custom_call.1} parent=43 // pred_check_branch
        %1205 = sbr.rel (%p1203) target = $region48
      $region47: #{tpu_custom_call.1} parent=43 // pred_region
        %s1206 = smul.u32 8, %s22
        %p1207 = scmp.lt.s32.totalorder %s21, 1
        %s1208 = scalar_select %p1207, %s21, 1
        %p1209 = scmp.lt.s32.totalorder %s1206, 7
        %s1210 = scalar_select %p1209, %s1206, 7
        %s1211 = smul.addr %s1208, 8
        %s1212 = sadd.s32 %s1210, %s1211
        %s1213 = smul.addr %s1212, 8
        %s1214 = scalar_lea.vmem %s4, %s1213
      $region48: #{tpu_custom_call.1} parent=43 // pred_fallthru
        _
    $region44: #{tpu_custom_call.1} parent=5 // pred_fallthru
      _
  $region6: #{tpu_custom_call.1} parent=0 // loop_footer
    %s14 = sadd.s32 1, %s10
  $region7: #{tpu_custom_call.1} parent=0 // loop_footer_branch
    %9 = sbr.rel target = $region3
  $region8: #{tpu_custom_call.1} parent=0 // loop_exit
    _

</llo_original>
